<compile_context>
chip_gen: v5e
topology: v5e:2x2
jax: 0.10.0
libtpu: 0.0.40
codegen_flags: <defaults>
</compile_context>

<pallas_src>
import functools
import math

import jax
import jax.numpy as jnp
from jax.experimental import pallas as pl
from jax.experimental.pallas import tpu as pltpu


def _round_up(x: int, m: int) -> int:
    return ((x + m - 1) // m) * m


def _sublane(itemsize: int) -> int:
    return {4: 8, 2: 16, 1: 32}.get(itemsize, 8)


def _vmem_limit_bytes(need: int) -> int:
    # Explicit scoped-VMEM budget: at least 32 MiB (raises v5e's 16 MiB
    # default), at most 64 MiB (v7x physical VMEM per TensorCore).
    return int(min(max(32 << 20, need + need // 2 + (2 << 20)), 64 << 20))


def _choose_block_tokens(n_tokens, d_pad, itemsize, requested, sub):
    """Token-block size: large for throughput, capped by a VMEM budget for the
    double-buffered output block, and small enough to give >= 2 grid steps."""
    budget = 16 << 20  # bytes for 2 * (tb, D_pad) output buffers
    cap = max(sub, (budget // (2 * d_pad * itemsize)) // sub * sub)
    n_sub = _round_up(n_tokens, sub)
    tb = max(sub, (min(requested, cap, n_sub) // sub) * sub)
    # Prefer >= 2 grid steps so ("parallel",) can shard across v7x's 2 TCs.
    if n_sub // tb < 2:
        half = _round_up(max(n_sub // 2, sub), sub)
        if half < tb:
            tb = half
    return tb


# ---------------------------------------------------------------------------
# Fast path: VMEM-resident table, one-hot MXU gather.
# ---------------------------------------------------------------------------
def _onehot_gather_kernel(ids_ref, table_ref, out_ref, *, scale):
    # ids_ref  : VMEM (tb, 1) int32 token ids for this block
    # table_ref: VMEM (V_pad, D_pad) full table (block index constant -> loaded once)
    # out_ref  : VMEM (tb, D_pad)
    ids = ids_ref[...]                                             # (tb, 1)
    vocab = table_ref.shape[0]
    iota = jax.lax.broadcasted_iota(jnp.int32, (ids.shape[0], vocab), 1)
    onehot = (ids == iota).astype(table_ref.dtype)                 # (tb, V_pad)
    gathered = jnp.dot(onehot, table_ref[...],
                       preferred_element_type=jnp.float32,
                       precision=jax.lax.Precision.HIGHEST)
    out_ref[...] = (gathered * scale).astype(out_ref.dtype)


# ---------------------------------------------------------------------------
# Large-vocab path: HBM table, per-row DMA ring landing directly in out_ref.
# ---------------------------------------------------------------------------
def _dma_gather_kernel(ids_ref, table_hbm, out_ref, sems, *,
                       scale, block_tokens, num_sems, d_cols):
    # ids_ref  : SMEM (N_pad + num_sems,) int32 (scalar prefetch)
    # table_hbm: HBM  (V, D)  -- never padded, never copied wholesale
    # out_ref  : VMEM (tb, D_pad) output block (rows DMA'd straight into it)
    # sems     : DMA semaphores (num_sems,)
    base = pl.program_id(0) * block_tokens

    def start_row(t, row_id):
        pltpu.make_async_copy(
            table_hbm.at[pl.ds(row_id, 1), :],
            out_ref.at[pl.ds(t, 1), pl.ds(0, d_cols)],
            sems.at[t % num_sems],
        ).start()

    def wait_row(t):
        # Wait only needs the semaphore + transfer shape; use a static src row.
        pltpu.make_async_copy(
            table_hbm.at[pl.ds(0, 1), :],
            out_ref.at[pl.ds(t, 1), pl.ds(0, d_cols)],
            sems.at[t % num_sems],
        ).wait()

    # Prime the DMA ring (fully unrolled: num_sems / block_tokens are Python ints).
    for t in range(min(num_sems, block_tokens)):
        start_row(t, ids_ref[base + t])

    # Sliding window: wait row t, reuse its sem slot for row t + num_sems.
    # Unrolled by 8 rows per iteration; the next-row SMEM id read is hoisted
    # above the wait so descriptor issue is not serialized behind it.
    unroll = 8

    @pl.loop(0, block_tokens // unroll)
    def _(u):
        t0 = pl.multiple_of(u * unroll, unroll)
        for j in range(unroll):
            t = t0 + j
            nxt = t + num_sems
            next_id = ids_ref[base + nxt]      # ids padded by num_sems -> in-bounds
            wait_row(t)

            @pl.when(nxt < block_tokens)
            def _():
                start_row(nxt, next_id)

    # Single fused VPU pass: scale in place.  Columns d_cols..D_pad hold
    # garbage (never DMA'd); the wrapper slices them off.
    out_ref[...] = out_ref[...] * scale


# ---------------------------------------------------------------------------
# Wrapper (== IOEmbeddingBlock.forward)
# ---------------------------------------------------------------------------
def io_embedding_block(x, emb_table, *, block_tokens=512, num_sems=16,
                       max_table_vmem_bytes=8 << 20):
    """x: (B, S) integer token ids; emb_table: (V, D) float.

    Returns (B, S, D) = emb_table[x] * sqrt(D).
    """
    B, S = x.shape
    V, D = emb_table.shape
    N = B * S
    dtype = emb_table.dtype
    itemsize = jnp.dtype(dtype).itemsize
    sub = _sublane(itemsize)
    scale = float(math.sqrt(D))           # uses the ORIGINAL d_model

    D_pad = _round_up(D, 128)             # lane-dense output stores
    # Clamp ids so every gather address is in-bounds (PyTorch raises on OOB).
    ids = jnp.clip(x.reshape(N).astype(jnp.int32), 0, V - 1)

    tb = _choose_block_tokens(N, D_pad, itemsize, block_tokens, sub)
    N_pad = _round_up(N, tb)
    grid = (N_pad // tb,)

    vocab_pad = _round_up(V, sub)
    table_bytes = vocab_pad * D_pad * itemsize
    out_block_bytes = 2 * tb * D_pad * itemsize      # double-buffered output

    if table_bytes <= max_table_vmem_bytes:
        # ---- small-vocab fast path: VMEM-resident table + one-hot MXU gather.
        ids2 = jnp.pad(ids, (0, N_pad - N)).reshape(N_pad, 1)
        table_p = emb_table
        if vocab_pad != V or D_pad != D:   # cheap: table is small by definition
            table_p = jnp.pad(emb_table, ((0, vocab_pad - V), (0, D_pad - D)))
        need = out_block_bytes + 2 * table_bytes + 2 * tb * 128 * 4
        out_flat = pl.pallas_call(
            functools.partial(_onehot_gather_kernel, scale=scale),
            out_shape=jax.ShapeDtypeStruct((N_pad, D_pad), dtype),
            grid_spec=pltpu.PrefetchScalarGridSpec(
                num_scalar_prefetch=0,
                grid=grid,
                in_specs=[
                    pl.BlockSpec((tb, 1), lambda i: (i, 0)),
                    pl.BlockSpec((vocab_pad, D_pad), lambda i: (0, 0)),
                ],
                out_specs=pl.BlockSpec((tb, D_pad), lambda i: (i, 0)),
            ),
            compiler_params=pltpu.CompilerParams(
                dimension_semantics=("parallel",),
                vmem_limit_bytes=_vmem_limit_bytes(need)),
        )(ids2, table_p)
    else:
        # ---- large-vocab path: HBM table, per-row DMA ring into out_ref.
        # Pad ids by num_sems so the hoisted "next id" SMEM reads are in-bounds.
        ids1 = jnp.pad(ids, (0, N_pad - N + num_sems))
        need = out_block_bytes
        out_flat = pl.pallas_call(
            functools.partial(_dma_gather_kernel, scale=scale,
                              block_tokens=tb, num_sems=num_sems, d_cols=D),
            out_shape=jax.ShapeDtypeStruct((N_pad, D_pad), dtype),
            grid_spec=pltpu.PrefetchScalarGridSpec(
                num_scalar_prefetch=1,                      # ids -> SMEM
                grid=grid,
                in_specs=[pl.BlockSpec(memory_space=pl.ANY)],  # table stays in HBM
                out_specs=pl.BlockSpec((tb, D_pad), lambda i, ids_ref: (i, 0)),
                scratch_shapes=[pltpu.SemaphoreType.DMA((num_sems,))],
            ),
            compiler_params=pltpu.CompilerParams(
                dimension_semantics=("parallel",),
                vmem_limit_bytes=_vmem_limit_bytes(need)),
        )(ids1, emb_table)

    return out_flat[:N, :D].reshape(B, S, D)


if __name__ == "__main__":
    key = jax.random.PRNGKey(0)

    def _run_and_check(d_model, vocab, B, S, key, **kw):
        k1, k2, key = jax.random.split(key, 3)
        emb = jax.random.normal(k1, (vocab, d_model), dtype=jnp.float32)
        x = jax.random.randint(k2, (B, S), 0, vocab, dtype=jnp.int32)
        out = jax.block_until_ready(io_embedding_block(x, emb, **kw))
        ref = emb[x] * math.sqrt(d_model)
        assert out.shape == (B, S, d_model), (out.shape, (B, S, d_model))
        assert jnp.allclose(out, ref, atol=1e-5, rtol=1e-5), \
            f"mismatch vs reference (d_model={d_model}, vocab={vocab})"
        return key

    # 1) Module's toy shapes (d_model=32 padded to 128 lanes) -> fast path.
    key = _run_and_check(32, 50, 2, 8, key)

    # 2) Lane-dense d_model, multi-block grid (N=512 -> 2 token blocks) -> fast path.
    key = _run_and_check(128, 64, 4, 128, key)

    # 3) Force the large-vocab DMA-gather path (table budget set to 0) to
    #    exercise the HBM row-DMA ring + direct-into-out_ref + fused scale.
    key = _run_and_check(256, 256, 2, 64, key, max_table_vmem_bytes=0)

    print("KERNEL_OK")
</pallas_src>

<mosaic_0001>
module attributes {stable_mosaic.version = 11 : i64} {
  func.func @_onehot_gather_kernel(%arg0: i32, %arg1: memref<8x1xi32, #tpu.memory_space<vmem>>, %arg2: memref<56x128xf32, #tpu.memory_space<vmem>>, %arg3: memref<8x128xf32, #tpu.memory_space<vmem>>) attributes {dimension_semantics = [#tpu.dimension_semantics<parallel>], iteration_bounds = array<i64: 2>, scalar_prefetch = 0 : i64, scratch_operands = 0 : i64, tpu.core_type = #tpu.core_type<tc>, window_params = [{transform_indices = @transform_0, window_bounds = array<i64: 8, 1>}, {pipeline_mode = #tpu.pipeline_mode<synchronous>, transform_indices = @transform_1, window_bounds = array<i64: 56, 128>}, {transform_indices = @transform_2, window_bounds = array<i64: 8, 128>}]} {
    %c0 = arith.constant 0 : index
    %c0_0 = arith.constant 0 : index
    %0 = vector.load %arg1[%c0, %c0_0] : memref<8x1xi32, #tpu.memory_space<vmem>>, vector<8x1xi32>
    %1 = tpu.iota {dimensions = array<i32: 1>} : vector<8x56xi32>
    %2 = vector.broadcast %0 : vector<8x1xi32> to vector<8x56xi32>
    %3 = arith.cmpi eq, %2, %1 : vector<8x56xi32>
    %4 = arith.extui %3 : vector<8x56xi1> to vector<8x56xi32>
    %5 = arith.sitofp %4 : vector<8x56xi32> to vector<8x56xf32>
    %c0_1 = arith.constant 0 : index
    %c0_2 = arith.constant 0 : index
    %6 = vector.load %arg2[%c0_1, %c0_2] : memref<56x128xf32, #tpu.memory_space<vmem>>, vector<56x128xf32>
    %cst = arith.constant dense<0.000000e+00> : vector<8x128xf32>
    %7 = tpu.matmul %5, %6, %cst {dimension_numbers = #tpu.dot_dimension_numbers<[1], [0], [0], [1], [0, 0, 1, 1], [], []>, precision = #tpu.contract_precision<fp32>} : vector<8x56xf32>, vector<56x128xf32>, vector<8x128xf32> -> vector<8x128xf32>
    %cst_3 = arith.constant 5.65685415 : f32
    %8 = vector.broadcast %cst_3 : f32 to vector<8x128xf32>
    %9 = arith.mulf %7, %8 : vector<8x128xf32>
    %c0_4 = arith.constant 0 : index
    %c0_5 = arith.constant 0 : index
    %10 = vector.load %arg3[%c0_4, %c0_5] : memref<8x128xf32, #tpu.memory_space<vmem>>, vector<8x128xf32>
    tpu.vector_store %arg3[%c0_4, %c0_5], %9 {strides = array<i32>} : memref<8x128xf32, #tpu.memory_space<vmem>>, vector<8x128xf32>,
    return
  }
  func.func @transform_0(%arg0: i32) -> (i32, i32) {
    %c0_i32 = arith.constant 0 : i32
    %c0_i32_0 = arith.constant 0 : i32
    return %arg0, %c0_i32 : i32, i32
  }
  func.func @transform_1(%arg0: i32) -> (i32, i32) {
    %c0_i32 = arith.constant 0 : i32
    %c0_i32_0 = arith.constant 0 : i32
    %c0_i32_1 = arith.constant 0 : i32
    return %c0_i32, %c0_i32_0 : i32, i32
  }
  func.func @transform_2(%arg0: i32) -> (i32, i32) {
    %c0_i32 = arith.constant 0 : i32
    %c0_i32_0 = arith.constant 0 : i32
    return %arg0, %c0_i32 : i32, i32
  }
}

</mosaic_0001>

<llo_original>
// kernel: tpu_custom_call.1
$region0: #{tpu_custom_call.1}
  #allocation0 [shape = 'u32[]', space=smem, size = 0x4, offset = 0x4, fixed_abs, tag = 'smem constant byte address 0x4 - core index']
  #allocation1 [shape = 'u32[72,128]{1,0:T(1,128)}', space=vmem, size = 0x9000, scoped, tag = 'internal scratch']
  %s0 = inlined_call_operand.vmem [shape: s32[16,1], index: 0, kind: input, shape index: {}]
  %s1 = inlined_call_operand.hbm [shape: f32[56,128], index: 1, kind: input, shape index: {}]
  %s2 = inlined_call_operand.hbm [shape: f32[16,128], index: 2, kind: output, shape index: {}]
  %s3 = sld [smem:[#allocation0]]
  $region45: #{tpu_custom_call.1} parent=0
    _
  %s5 = ssub.s32 1, %s3
  %s6 = scalar_select 0, %s5, %s3
  $region1: #{tpu_custom_call.1} parent=0
    #allocation2 [shape = 'u8[28672]{0}', space=vmem, size = 0x7000, scoped, tag = 'input window, operand 1, single buffered']
    #allocation3 [shape = 's32[2]{0}', space=sflag, size = 0x8, scoped, tag = 'scoped memory for tpu_custom_call.1']
    #allocation4 [shape = 's32[2]{0}', space=sflag, size = 0x8, scoped, tag = 'scoped memory for tpu_custom_call.1']
    #allocation5 [shape = 'u8[8192]{0}', space=vmem, size = 0x2000, scoped, tag = 'output window, operand 0']
    %7 = vsyncpa [#allocation3], 0
    %8 = vsyncpa [#allocation4], 0
    %s9 = scalar_lea.sflag [#allocation4], 1
    %10 = vsyncpa %s9, 0
    loop: start=0, step=1, limit=4
    $region2: #{tpu_custom_call.1} parent=1 // loop_pre_header
      _
    $region3: #{tpu_custom_call.1} parent=1 // loop_header
      %s12 = sphi 0, %s16
      %p13 = scmp.ge.s32.totalorder %s12, 4
      %s22 = sphi 0, %s24
      %s25 = sphi 0, %s22
      %s26 = sphi 0, %s25
      %s42 = sphi 0, %s26
      %s46 = sphi 0, %s46
      %s48 = sphi 0, %s46
      %s49 = sphi 0, %s48
      %s63 = sphi 0, %s49
      %s69 = sphi 0, %s71
      %s72 = sphi 0, %s69
      %s73 = sphi 0, %s72
      %s89 = sphi 0, %s73
    $region4: #{tpu_custom_call.1} parent=1 // loop_header_branch
      %15 = sbr.rel (%p13) target = $region8
    $region5: #{tpu_custom_call.1} parent=1 // loop_body
      %s17 = ssub.s32 %s12, 1
      %s18 = ssub.s32 %s12, 2
      %s19 = sadd.s32 %s12, 1
      %s20 = ssub.s32 %s12, %s19
      %p21 = scmp.eq.s32.totalorder %s20, 0
      %s23 = sadd.s32 %s22, 1
      %s24 = scalar_select %p21, %s22, %s23
      %p27 = pneg %p21
      %p28 = scmp.eq.s32.totalorder %s12, 1
      %p29 = por %p27, %p28
      %p30 = scmp.ne.s32.totalorder %s22, %s25
      %p31 = scmp.eq.s32.totalorder %s12, 0
      %p32 = por %p30, %p31
      %p33 = scmp.ne.s32.totalorder %s22, %s25
      %p34 = scmp.eq.s32.totalorder %s17, 1
      %p35 = por %p33, %p34
      %p36 = scmp.ne.s32.totalorder %s25, %s26
      %p37 = scmp.eq.s32.totalorder %s17, 0
      %p38 = por %p36, %p37
      %p39 = scmp.ne.s32.totalorder %s25, %s26
      %p40 = scmp.eq.s32.totalorder %s18, 1
      %p41 = por %p39, %p40
      %p43 = scmp.ne.s32.totalorder %s26, %s42
      %p44 = scmp.eq.s32.totalorder %s18, 0
      %p45 = por %p43, %p44
      %s47 = sadd.s32 %s46, 1
      %p50 = scmp.eq.s32.totalorder %s12, 1
      %p51 = scmp.ne.s32.totalorder %s46, %s48
      %p52 = scmp.eq.s32.totalorder %s12, 0
      %p53 = por %p51, %p52
      %p54 = scmp.ne.s32.totalorder %s46, %s48
      %p55 = scmp.eq.s32.totalorder %s17, 1
      %p56 = por %p54, %p55
      %p57 = scmp.ne.s32.totalorder %s48, %s49
      %p58 = scmp.eq.s32.totalorder %s17, 0
      %p59 = por %p57, %p58
      %p60 = scmp.ne.s32.totalorder %s48, %s49
      %p61 = scmp.eq.s32.totalorder %s18, 1
      %p62 = por %p60, %p61
      %p64 = scmp.ne.s32.totalorder %s49, %s63
      %p65 = scmp.eq.s32.totalorder %s18, 0
      %p66 = por %p64, %p65
      %s67 = ssub.s32 %s12, %s19
      %p68 = scmp.eq.s32.totalorder %s67, 0
      %s70 = sadd.s32 %s69, 1
      %s71 = scalar_select %p68, %s69, %s70
      %p74 = pneg %p68
      %p75 = scmp.eq.s32.totalorder %s12, 1
      %p76 = por %p74, %p75
      %p77 = scmp.ne.s32.totalorder %s69, %s72
      %p78 = scmp.eq.s32.totalorder %s12, 0
      %p79 = por %p77, %p78
      %p80 = scmp.ne.s32.totalorder %s69, %s72
      %p81 = scmp.eq.s32.totalorder %s17, 1
      %p82 = por %p80, %p81
      %p83 = scmp.ne.s32.totalorder %s72, %s73
      %p84 = scmp.eq.s32.totalorder %s17, 0
      %p85 = por %p83, %p84
      %p86 = scmp.ne.s32.totalorder %s72, %s73
      %p87 = scmp.eq.s32.totalorder %s18, 1
      %p88 = por %p86, %p87
      %p90 = scmp.ne.s32.totalorder %s73, %s89
      %p91 = scmp.eq.s32.totalorder %s18, 0
      %p92 = por %p90, %p91
      %p93 = scmp.le.s32.totalorder 1, %s12
      %p94 = scmp.lt.s32.totalorder %s12, 3
      %p95 = pnand %p93, %p94
      %p96 = pneg %p95
      // Predicated region
      $region9: #{tpu_custom_call.1} parent=5 // pred_check
        _
      $region10: #{tpu_custom_call.1} parent=5 // pred_check_branch
        %98 = sbr.rel (%p95) target = $region12
      $region11: #{tpu_custom_call.1} parent=5 // pred_region
        %s99 = ssub.s32 %s12, 1
        // Predicated region
        $region13: #{tpu_custom_call.1} parent=11 // pred_check
          %p100 = pneg %p59
        $region14: #{tpu_custom_call.1} parent=11 // pred_check_branch
          %102 = sbr.rel (%p100) target = $region16
        $region15: #{tpu_custom_call.1} parent=11 // pred_region
          %104 = vsyncadd [#allocation3], 0
          %s105 = sshll.u32 %s1, 4
          %s106 = int_to_ptr.hbm [resolvable:$true] %s105
          %s107 = sshll.u32 [#allocation2], 4
          %s108 = int_to_ptr.vmem [resolvable:$true] %s107
          %113 = dma.hbm_to_vmem [thread:$0]  %s106, 896, %s108, [#allocation3], 128, 128, 8
        $region16: #{tpu_custom_call.1} parent=11 // pred_fallthru
          _
      $region12: #{tpu_custom_call.1} parent=5 // pred_fallthru
        _
      %p114 = scmp.lt.s32.totalorder %s12, 2
      // Predicated region
      $region17: #{tpu_custom_call.1} parent=5 // pred_check
        %p115 = pneg %p114
      $region18: #{tpu_custom_call.1} parent=5 // pred_check_branch
        %117 = sbr.rel (%p115) target = $region20
      $region19: #{tpu_custom_call.1} parent=5 // pred_region
        // Predicated region
        $region21: #{tpu_custom_call.1} parent=19 // pred_check
          %p118 = pneg %p32
        $region22: #{tpu_custom_call.1} parent=19 // pred_check_branch
          %120 = sbr.rel (%p118) target = $region24
        $region23: #{tpu_custom_call.1} parent=19 // pred_region
          %p121 = scmp.lt.s32.totalorder %s12, 1
          %s122 = scalar_select %p121, %s12, 1
          %s123 = smul.addr %s122, 8
          %s124 = scalar_lea.vmem %s0, %s123
        $region24: #{tpu_custom_call.1} parent=19 // pred_fallthru
          _
      $region20: #{tpu_custom_call.1} parent=5 // pred_fallthru
        _
      %p125 = scmp.le.s32.totalorder 1, %s12
      %p126 = scmp.lt.s32.totalorder %s12, 3
      %p127 = pnand %p125, %p126
      %p128 = pneg %p127
      // Predicated region
      $region25: #{tpu_custom_call.1} parent=5 // pred_check
        _
      $region26: #{tpu_custom_call.1} parent=5 // pred_check_branch
        %130 = sbr.rel (%p127) target = $region28
      $region27: #{tpu_custom_call.1} parent=5 // pred_region
        %s131 = ssub.s32 %s12, 1
        // Predicated region
        $region29: #{tpu_custom_call.1} parent=27 // pred_check
          %p132 = pneg %p59
        $region30: #{tpu_custom_call.1} parent=27 // pred_check_branch
          %134 = sbr.rel (%p132) target = $region32
        $region31: #{tpu_custom_call.1} parent=27 // pred_region
          %136 = dma.done [#allocation3], 896
        $region32: #{tpu_custom_call.1} parent=27 // pred_fallthru
          _
        %p137 = scmp.lt.s32.totalorder %s17, 1
        %s138 = scalar_select %p137, %s17, 1
        %s139 = smul.addr %s138, 8
        %s140 = scalar_lea.vmem %s0, %s139
        %p141 = pneg %p38
        %p142 = pneg %p35
        %p143 = pneg %p59
        %p144 = pneg %p56
        %p145 = pneg %p85
        %p146 = pneg %p82
        %s147 = sand.u32 %s72, 1
        %s148 = scalar_lea.sflag [#allocation4], %s147
        %s149 = sand.u32 %s72, 1
        %s150 = smul.addr %s149, 8
        %s151 = scalar_lea.vmem [#allocation5], %s150
        %p152 = scmp.lt.s32.totalorder %s17, 1
        %s153 = scalar_select %p152, %s17, 1
        %s154 = smul.addr %s153, 8
        %s155 = scalar_lea.vmem %s0, %s154
        %v156 = vld [vmem:[%s155] sm:$0xff]
        %v157 = vlaneseq
        %v158 = vand.u32 %v157, 127
        %159 = vset.pattern.permute.xlu0 0
        %160 = vperm.xlu0 %159, %v156
        %v161 = vpop.permute.xlu0 %160
        %vm162 = vcmp.eq.s32.totalorder %v161, %v158
        %v163 = vsel %vm162, 1, 0
        %v164 = vcvt.s32.f32 %v163
        %v165 = vld [vmem:[#allocation2] sm:$0xff]
        %v166 = vld [vmem:[#allocation2 + $0x8] sm:$0xff]
        %v167 = vld [vmem:[#allocation2 + $0x10] sm:$0xff]
        %v168 = vld [vmem:[#allocation2 + $0x18] sm:$0xff]
        %v169 = vld [vmem:[#allocation2 + $0x20] sm:$0xff]
        %v170 = vld [vmem:[#allocation2 + $0x28] sm:$0xff]
        %v171 = vld [vmem:[#allocation2 + $0x30] sm:$0xff]
        %vm172 = vcmask 457728
        %v174 = vsel %vm172, %v164, 0
        %176 = vmatpush.msra.mxu0 0.0
        %177 = vmatpush.msra.mxu0 0.0
        %178 = vmatpush.msra.mxu0 0.0
        %179 = vmatpush.msra.mxu0 0.0
        %180 = vmatpush.msra.mxu0 0.0
        %181 = vmatpush.msra.mxu0 0.0
        %182 = vmatpush.msra.mxu0 0.0
        %183 = vmatpush.msra.mxu0 0.0
        %184 = vmatpush.msra.mxu0 0.0
        %v185 = vand.u32 %v171, 4294901760
        %186 = vmatpush.msra.mxu0 %v185
        %v187 = vand.u32 %v170, 4294901760
        %188 = vmatpush.msra.mxu0 %v187
        %v189 = vand.u32 %v169, 4294901760
        %190 = vmatpush.msra.mxu0 %v189
        %v191 = vand.u32 %v168, 4294901760
        %192 = vmatpush.msra.mxu0 %v191
        %v193 = vand.u32 %v167, 4294901760
        %194 = vmatpush.msra.mxu0 %v193
        %v195 = vand.u32 %v166, 4294901760
        %196 = vmatpush.msra.mxu0 %v195
        %v197 = vand.u32 %v165, 4294901760
        %198 = vmatpush.msra.mxu0 %v197
        %v199 = vand.u32 %v174, 4294901760
        %v200 = vsub.f32 %v174, %v199
        %v201 = vand.u32 %v200, 4294901760
        %v202 = vsub.f32 %v200, %v201
        %v203 = vand.u32 %v202, 4294901760
        %204 = vmatmul.f32.gmra.mxu0 %v203
        %v205 = vpop.f32.mrf.mxu0
        %v206 = vadd.f32 0.0, %v205
        %207 = vdwg.mxu0
        %208 = vmatpush.msra.mxu0 0.0
        %209 = vmatpush.msra.mxu0 0.0
        %210 = vmatpush.msra.mxu0 0.0
        %211 = vmatpush.msra.mxu0 0.0
        %212 = vmatpush.msra.mxu0 0.0
        %213 = vmatpush.msra.mxu0 0.0
        %214 = vmatpush.msra.mxu0 0.0
        %215 = vmatpush.msra.mxu0 0.0
        %216 = vmatpush.msra.mxu0 0.0
        %v217 = vand.u32 %v171, 4294901760
        %v218 = vsub.f32 %v171, %v217
        %v219 = vand.u32 %v218, 4294901760
        %v220 = vsub.f32 %v218, %v219
        %v221 = vand.u32 %v220, 4294901760
        %222 = vmatpush.msra.mxu0 %v221
        %v223 = vand.u32 %v170, 4294901760
        %v224 = vsub.f32 %v170, %v223
        %v225 = vand.u32 %v224, 4294901760
        %v226 = vsub.f32 %v224, %v225
        %v227 = vand.u32 %v226, 4294901760
        %228 = vmatpush.msra.mxu0 %v227
        %v229 = vand.u32 %v169, 4294901760
        %v230 = vsub.f32 %v169, %v229
        %v231 = vand.u32 %v230, 4294901760
        %v232 = vsub.f32 %v230, %v231
        %v233 = vand.u32 %v232, 4294901760
        %234 = vmatpush.msra.mxu0 %v233
        %v235 = vand.u32 %v168, 4294901760
        %v236 = vsub.f32 %v168, %v235
        %v237 = vand.u32 %v236, 4294901760
        %v238 = vsub.f32 %v236, %v237
        %v239 = vand.u32 %v238, 4294901760
        %240 = vmatpush.msra.mxu0 %v239
        %v241 = vand.u32 %v167, 4294901760
        %v242 = vsub.f32 %v167, %v241
        %v243 = vand.u32 %v242, 4294901760
        %v244 = vsub.f32 %v242, %v243
        %v245 = vand.u32 %v244, 4294901760
        %246 = vmatpush.msra.mxu0 %v245
        %v247 = vand.u32 %v166, 4294901760
        %v248 = vsub.f32 %v166, %v247
        %v249 = vand.u32 %v248, 4294901760
        %v250 = vsub.f32 %v248, %v249
        %v251 = vand.u32 %v250, 4294901760
        %252 = vmatpush.msra.mxu0 %v251
        %v253 = vand.u32 %v165, 4294901760
        %v254 = vsub.f32 %v165, %v253
        %v255 = vand.u32 %v254, 4294901760
        %v256 = vsub.f32 %v254, %v255
        %v257 = vand.u32 %v256, 4294901760
        %258 = vmatpush.msra.mxu0 %v257
        %v259 = vand.u32 %v174, 4294901760
        %260 = vmatmul.f32.gmra.mxu0 %v259
        %v261 = vpop.f32.mrf.mxu0
        %v262 = vadd.f32 %v206, %v261
        %263 = vdwg.mxu0
        %264 = vmatpush.msra.mxu0 0.0
        %265 = vmatpush.msra.mxu0 0.0
        %266 = vmatpush.msra.mxu0 0.0
        %267 = vmatpush.msra.mxu0 0.0
        %268 = vmatpush.msra.mxu0 0.0
        %269 = vmatpush.msra.mxu0 0.0
        %270 = vmatpush.msra.mxu0 0.0
        %271 = vmatpush.msra.mxu0 0.0
        %272 = vmatpush.msra.mxu0 0.0
        %v273 = vand.u32 %v171, 4294901760
        %v274 = vsub.f32 %v171, %v273
        %275 = vmatpush.msra.mxu0 %v274
        %v276 = vand.u32 %v170, 4294901760
        %v277 = vsub.f32 %v170, %v276
        %278 = vmatpush.msra.mxu0 %v277
        %v279 = vand.u32 %v169, 4294901760
        %v280 = vsub.f32 %v169, %v279
        %281 = vmatpush.msra.mxu0 %v280
        %v282 = vand.u32 %v168, 4294901760
        %v283 = vsub.f32 %v168, %v282
        %284 = vmatpush.msra.mxu0 %v283
        %v285 = vand.u32 %v167, 4294901760
        %v286 = vsub.f32 %v167, %v285
        %287 = vmatpush.msra.mxu0 %v286
        %v288 = vand.u32 %v166, 4294901760
        %v289 = vsub.f32 %v166, %v288
        %290 = vmatpush.msra.mxu0 %v289
        %v291 = vand.u32 %v165, 4294901760
        %v292 = vsub.f32 %v165, %v291
        %293 = vmatpush.msra.mxu0 %v292
        %v294 = vand.u32 %v174, 4294901760
        %v295 = vsub.f32 %v174, %v294
        %296 = vmatmul.f32.gmra.mxu0 %v295
        %v297 = vpop.f32.mrf.mxu0
        %v298 = vadd.f32 %v262, %v297
        %299 = vdwg.mxu0
        %300 = vmatpush.msra.mxu0 0.0
        %301 = vmatpush.msra.mxu0 0.0
        %302 = vmatpush.msra.mxu0 0.0
        %303 = vmatpush.msra.mxu0 0.0
        %304 = vmatpush.msra.mxu0 0.0
        %305 = vmatpush.msra.mxu0 0.0
        %306 = vmatpush.msra.mxu0 0.0
        %307 = vmatpush.msra.mxu0 0.0
        %308 = vmatpush.msra.mxu0 0.0
        %v309 = vand.u32 %v171, 4294901760
        %310 = vmatpush.msra.mxu0 %v309
        %v311 = vand.u32 %v170, 4294901760
        %312 = vmatpush.msra.mxu0 %v311
        %v313 = vand.u32 %v169, 4294901760
        %314 = vmatpush.msra.mxu0 %v313
        %v315 = vand.u32 %v168, 4294901760
        %316 = vmatpush.msra.mxu0 %v315
        %v317 = vand.u32 %v167, 4294901760
        %318 = vmatpush.msra.mxu0 %v317
        %v319 = vand.u32 %v166, 4294901760
        %320 = vmatpush.msra.mxu0 %v319
        %v321 = vand.u32 %v165, 4294901760
        %322 = vmatpush.msra.mxu0 %v321
        %v323 = vand.u32 %v174, 4294901760
        %v324 = vsub.f32 %v174, %v323
        %v325 = vand.u32 %v324, 4294901760
        %326 = vmatmul.f32.gmra.mxu0 %v325
        %v327 = vpop.f32.mrf.mxu0
        %v328 = vadd.f32 %v298, %v327
        %329 = vdwg.mxu0
        %330 = vmatpush.msra.mxu0 0.0
        %331 = vmatpush.msra.mxu0 0.0
        %332 = vmatpush.msra.mxu0 0.0
        %333 = vmatpush.msra.mxu0 0.0
        %334 = vmatpush.msra.mxu0 0.0
        %335 = vmatpush.msra.mxu0 0.0
        %336 = vmatpush.msra.mxu0 0.0
        %337 = vmatpush.msra.mxu0 0.0
        %338 = vmatpush.msra.mxu0 0.0
        %v339 = vand.u32 %v171, 4294901760
        %v340 = vsub.f32 %v171, %v339
        %v341 = vand.u32 %v340, 4294901760
        %342 = vmatpush.msra.mxu0 %v341
        %v343 = vand.u32 %v170, 4294901760
        %v344 = vsub.f32 %v170, %v343
        %v345 = vand.u32 %v344, 4294901760
        %346 = vmatpush.msra.mxu0 %v345
        %v347 = vand.u32 %v169, 4294901760
        %v348 = vsub.f32 %v169, %v347
        %v349 = vand.u32 %v348, 4294901760
        %350 = vmatpush.msra.mxu0 %v349
        %v351 = vand.u32 %v168, 4294901760
        %v352 = vsub.f32 %v168, %v351
        %v353 = vand.u32 %v352, 4294901760
        %354 = vmatpush.msra.mxu0 %v353
        %v355 = vand.u32 %v167, 4294901760
        %v356 = vsub.f32 %v167, %v355
        %v357 = vand.u32 %v356, 4294901760
        %358 = vmatpush.msra.mxu0 %v357
        %v359 = vand.u32 %v166, 4294901760
        %v360 = vsub.f32 %v166, %v359
        %v361 = vand.u32 %v360, 4294901760
        %362 = vmatpush.msra.mxu0 %v361
        %v363 = vand.u32 %v165, 4294901760
        %v364 = vsub.f32 %v165, %v363
        %v365 = vand.u32 %v364, 4294901760
        %366 = vmatpush.msra.mxu0 %v365
        %v367 = vand.u32 %v174, 4294901760
        %368 = vmatmul.f32.gmra.mxu0 %v367
        %v369 = vpop.f32.mrf.mxu0
        %v370 = vadd.f32 %v328, %v369
        %371 = vdwg.mxu0
        %372 = vmatpush.msra.mxu0 0.0
        %373 = vmatpush.msra.mxu0 0.0
        %374 = vmatpush.msra.mxu0 0.0
        %375 = vmatpush.msra.mxu0 0.0
        %376 = vmatpush.msra.mxu0 0.0
        %377 = vmatpush.msra.mxu0 0.0
        %378 = vmatpush.msra.mxu0 0.0
        %379 = vmatpush.msra.mxu0 0.0
        %380 = vmatpush.msra.mxu0 0.0
        %v381 = vand.u32 %v171, 4294901760
        %382 = vmatpush.msra.mxu0 %v381
        %v383 = vand.u32 %v170, 4294901760
        %384 = vmatpush.msra.mxu0 %v383
        %v385 = vand.u32 %v169, 4294901760
        %386 = vmatpush.msra.mxu0 %v385
        %v387 = vand.u32 %v168, 4294901760
        %388 = vmatpush.msra.mxu0 %v387
        %v389 = vand.u32 %v167, 4294901760
        %390 = vmatpush.msra.mxu0 %v389
        %v391 = vand.u32 %v166, 4294901760
        %392 = vmatpush.msra.mxu0 %v391
        %v393 = vand.u32 %v165, 4294901760
        %394 = vmatpush.msra.mxu0 %v393
        %v395 = vand.u32 %v174, 4294901760
        %396 = vmatmul.f32.gmra.mxu0 %v395
        %v397 = vpop.f32.mrf.mxu0
        %v398 = vadd.f32 %v370, %v397
        %399 = vdwg.mxu0
        %v400 = vmul.f32 %v398, 5.656854
        %401 = vst [vmem:[%s151] sm:$0xff] %v400
        %s402 = sand.u32 %s72, 1
        %s403 = scalar_lea.sflag [#allocation4], %s402
        %s404 = sand.u32 %s72, 1
        %s405 = smul.addr %s404, 8
        %s406 = scalar_lea.vmem [#allocation5], %s405
        // Predicated region
        $region33: #{tpu_custom_call.1} parent=27 // pred_check
          %p407 = pneg %p82
        $region34: #{tpu_custom_call.1} parent=27 // pred_check_branch
          %409 = sbr.rel (%p407) target = $region36
        $region35: #{tpu_custom_call.1} parent=27 // pred_region
          %411 = vsyncadd %s403, 0
          %s412 = smul.addr %s17, 8
          %s413 = scalar_lea.hbm %s2, %s412
          %s415 = sshll.u32 %s406, 4
          %s416 = int_to_ptr.vmem [resolvable:$true] %s415
          %s417 = sshll.u32 %s413, 4
          %s418 = int_to_ptr.hbm [resolvable:$true] %s417
          %420 = dma.vmem_to_hbm [thread:$0]  %s416, 128, %s418, %s403
        $region36: #{tpu_custom_call.1} parent=27 // pred_fallthru
          _
      $region28: #{tpu_custom_call.1} parent=5 // pred_fallthru
        _
      %p421 = scmp.le.s32.totalorder 2, %s12
      // Predicated region
      $region37: #{tpu_custom_call.1} parent=5 // pred_check
        %p422 = pneg %p421
      $region38: #{tpu_custom_call.1} parent=5 // pred_check_branch
        %424 = sbr.rel (%p422) target = $region40
      $region39: #{tpu_custom_call.1} parent=5 // pred_region
        %s425 = ssub.s32 %s12, 2
        // Predicated region
        $region41: #{tpu_custom_call.1} parent=39 // pred_check
          %p426 = pneg %p88
        $region42: #{tpu_custom_call.1} parent=39 // pred_check_branch
          %428 = sbr.rel (%p426) target = $region44
        $region43: #{tpu_custom_call.1} parent=39 // pred_region
          %s429 = sand.u32 %s73, 1
          %s430 = scalar_lea.sflag [#allocation4], %s429
          %s431 = sand.u32 %s73, 1
          %s432 = smul.addr %s431, 8
          %s433 = scalar_lea.vmem [#allocation5], %s432
          %435 = dma.done %s430, 128
        $region44: #{tpu_custom_call.1} parent=39 // pred_fallthru
          _
      $region40: #{tpu_custom_call.1} parent=5 // pred_fallthru
        _
    $region6: #{tpu_custom_call.1} parent=1 // loop_footer
      %s16 = sadd.s32 1, %s12
    $region7: #{tpu_custom_call.1} parent=1 // loop_footer_branch
      %11 = sbr.rel target = $region3
    $region8: #{tpu_custom_call.1} parent=1 // loop_exit
      _
    %436 = vsyncpa [#allocation3], 1
    %s437 = scalar_lea.sflag [#allocation3], 1
    %438 = vsyncpa %s437, 1
    %439 = vsyncpa [#allocation4], 1
    %s440 = scalar_lea.sflag [#allocation4], 1
    %441 = vsyncpa %s440, 1

</llo_original>
